<compile_context>
chip_gen: v5e
topology: v5e:2x2
jax: 0.10.0
libtpu: 0.0.40
codegen_flags: <defaults>
</compile_context>

<pallas_src>
import jax
import jax.numpy as jnp
from jax.experimental import pallas as pl
from jax.experimental.pallas import tpu as pltpu

_LANE = 128
_VMEM_BUDGET_BYTES = 16 * 1024 * 1024   # double-buffered stream working set
_MAX_TR = 1024                          # ~86% of HBM roofline measured at 1024


def _round_up(x, m):
    return (x + m - 1) // m * m


def _patch_applier_kernel(img_ref, adv_ref, out_ref):
    # Initialize from the image, then overwrite in patch order (last nonzero
    # patch wins), updating out_ref in place so no full-tile value is carried
    # across the statically unrolled patch loop (bounds vreg/VMEM live range).
    out_ref[...] = img_ref[...]
    n_patches = adv_ref.shape[1]
    for p in range(n_patches):
        adv = adv_ref[:, p]
        out_ref[...] = jnp.where(adv == 0, out_ref[...], adv)


def patch_applier(img_batch, adv_batch):
    """Apply adversarial patches to images.

    img_batch: (B, C, H, W)
    adv_batch: (B, P, C, H, W)
    returns:   (B, C, H, W)
    """
    B, C, H, W = img_batch.shape
    Bp, P, Cp, Hp, Wp = adv_batch.shape
    assert (B, C, H, W) == (Bp, Cp, Hp, Wp)
    dtype = img_batch.dtype
    assert adv_batch.dtype == dtype

    n = C * H * W
    itemsize = jnp.dtype(dtype).itemsize
    # Sublane packing factor: 8 rows for 32-bit, 16 for 16-bit, 32 for 8-bit.
    sublane = 8 * (4 // itemsize)

    cost = pl.CostEstimate(
        flops=2 * P * B * n,                       # compare + select per patch
        transcendentals=0,
        bytes_accessed=(P + 2) * B * n * itemsize, # img + P*adv in, out
    )

    if n % _LANE == 0:
        # ---- Lane-dense fast path (free reshape, ragged last row-tile). ----
        r0 = n // _LANE
        bytes_per_row = 2 * (P + 2) * _LANE * itemsize   # double-buffered streams
        max_tr = max(sublane,
                     _VMEM_BUDGET_BYTES // bytes_per_row // sublane * sublane)
        tr = min(_MAX_TR, max_tr, _round_up(r0, sublane))
        # Guarantee >=2 grid blocks so v7x megacore can use both TensorCores.
        if B * pl.cdiv(r0, tr) < 2 and r0 > sublane:
            tr = _round_up(pl.cdiv(r0, 2), sublane)
        grid = (B, pl.cdiv(r0, tr))

        img2d = img_batch.reshape(B, r0, _LANE)          # layout-free
        adv2d = adv_batch.reshape(B, P, r0, _LANE)       # layout-free

        ws = 2 * (P + 2) * tr * _LANE * itemsize
        vmem_limit = min(32 << 20, max(16 << 20, int(ws * 3 // 2)))

        out2d = pl.pallas_call(
            _patch_applier_kernel,
            out_shape=jax.ShapeDtypeStruct((B, r0, _LANE), dtype),
            grid_spec=pltpu.PrefetchScalarGridSpec(
                num_scalar_prefetch=0,
                grid=grid,
                in_specs=[
                    pl.BlockSpec((1, tr, _LANE), lambda b, r: (b, r, 0)),
                    pl.BlockSpec((1, P, tr, _LANE), lambda b, r: (b, 0, r, 0)),
                ],
                out_specs=pl.BlockSpec((1, tr, _LANE), lambda b, r: (b, r, 0)),
            ),
            compiler_params=pltpu.CompilerParams(
                dimension_semantics=("parallel", "parallel"),
                vmem_limit_bytes=vmem_limit,
            ),
            cost_estimate=cost,
        )(img2d, adv2d)
        return out2d.reshape(B, C, H, W)

    # ---- n % 128 != 0 fallback: no padding, no strip. ----
    # Flat (B, n) / (B, P, n) views (free); whole batch lives inside the block
    # so the last-two block dims satisfy the (8,128)-or-full-dim rule, and the
    # ragged final lane-tile is clipped by Pallas on write-back.
    img_flat = img_batch.reshape(B, n)
    adv_flat = adv_batch.reshape(B, P, n)

    pad_rows = 2 * _round_up(B, sublane) + B * _round_up(P, sublane)
    bytes_per_lane = 2 * pad_rows * itemsize             # double-buffered
    max_tn = max(_LANE,
                 _VMEM_BUDGET_BYTES // bytes_per_lane // _LANE * _LANE)
    tile_n = min(max_tn, _round_up(n, _LANE))
    grid = (pl.cdiv(n, tile_n),)

    ws = bytes_per_lane * tile_n
    vmem_limit = min(32 << 20, max(16 << 20, int(ws * 3 // 2)))

    out_flat = pl.pallas_call(
        _patch_applier_kernel,
        out_shape=jax.ShapeDtypeStruct((B, n), dtype),
        grid_spec=pltpu.PrefetchScalarGridSpec(
            num_scalar_prefetch=0,
            grid=grid,
            in_specs=[
                pl.BlockSpec((B, tile_n), lambda t: (0, t)),
                pl.BlockSpec((B, P, tile_n), lambda t: (0, 0, t)),
            ],
            out_specs=pl.BlockSpec((B, tile_n), lambda t: (0, t)),
        ),
        compiler_params=pltpu.CompilerParams(
            dimension_semantics=("parallel",),
            vmem_limit_bytes=vmem_limit,
        ),
        cost_estimate=cost,
    )(img_flat, adv_flat)
    return out_flat.reshape(B, C, H, W)


def patch_applier_ref(img_batch, adv_batch):
    """Pure-JAX reference matching the PyTorch forward exactly."""
    out = img_batch
    for p in range(adv_batch.shape[1]):
        adv = adv_batch[:, p]
        out = jnp.where(adv == 0, out, adv)
    return out


def _make_inputs(key, B, P, C, H, W):
    k_img, k_adv, k_mask = jax.random.split(key, 3)
    img_batch = jax.random.uniform(k_img, (B, C, H, W), dtype=jnp.float32)
    adv_vals = jax.random.uniform(k_adv, (B, P, C, H, W), dtype=jnp.float32)
    # Many adv entries exactly zero so the `adv == 0` branch is exercised.
    mask = jax.random.bernoulli(k_mask, p=0.5, shape=(B, P, 1, H, W))
    adv_batch = jnp.where(mask, adv_vals, 0.0).astype(jnp.float32)
    return img_batch, adv_batch


if __name__ == "__main__":
    key = jax.random.PRNGKey(0)
    k1, k2 = jax.random.split(key)

    # Case 1: C*H*W divisible by 128 (lane-dense path, ragged row-tile, no pad).
    B, P, C, H, W = 2, 8, 3, 16, 16
    img_batch, adv_batch = _make_inputs(k1, B, P, C, H, W)
    out = jax.block_until_ready(patch_applier(img_batch, adv_batch))
    ref = patch_applier_ref(img_batch, adv_batch)
    assert out.shape == (B, C, H, W)
    assert out.dtype == jnp.float32
    assert jnp.allclose(out, ref), "Pallas output does not match reference (case 1)"

    # Case 2: C*H*W NOT divisible by 128 (flat fallback, ragged lane-tile, no pad).
    B2, P2, C2, H2, W2 = 2, 4, 3, 13, 13
    img_batch2, adv_batch2 = _make_inputs(k2, B2, P2, C2, H2, W2)
    out2 = jax.block_until_ready(patch_applier(img_batch2, adv_batch2))
    ref2 = patch_applier_ref(img_batch2, adv_batch2)
    assert out2.shape == (B2, C2, H2, W2)
    assert jnp.allclose(out2, ref2), "Pallas output does not match reference (case 2)"

    print("KERNEL_OK")
</pallas_src>

<mosaic_0001>
module attributes {stable_mosaic.version = 11 : i64} {
  func.func @_patch_applier_kernel(%arg0: i32, %arg1: i32, %arg2: memref<1x8x128xf32, #tpu.memory_space<vmem>>, %arg3: memref<1x8x8x128xf32, #tpu.memory_space<vmem>>, %arg4: memref<1x8x128xf32, #tpu.memory_space<vmem>>) attributes {dimension_semantics = [#tpu.dimension_semantics<parallel>, #tpu.dimension_semantics<parallel>], iteration_bounds = array<i64: 2, 1>, scalar_prefetch = 0 : i64, scratch_operands = 0 : i64, tpu.core_type = #tpu.core_type<tc>, window_params = [{transform_indices = @transform_0, window_bounds = array<i64: 1, 8, 128>}, {transform_indices = @transform_1, window_bounds = array<i64: 1, 8, 8, 128>}, {transform_indices = @transform_2, window_bounds = array<i64: 1, 8, 128>}]} {
    %c0 = arith.constant 0 : index
    %c0_0 = arith.constant 0 : index
    %c0_1 = arith.constant 0 : index
    %0 = vector.load %arg2[%c0, %c0_0, %c0_1] : memref<1x8x128xf32, #tpu.memory_space<vmem>>, vector<1x8x128xf32>
    %c0_2 = arith.constant 0 : index
    %c0_3 = arith.constant 0 : index
    %c0_4 = arith.constant 0 : index
    %1 = vector.load %arg4[%c0_2, %c0_3, %c0_4] : memref<1x8x128xf32, #tpu.memory_space<vmem>>, vector<1x8x128xf32>
    tpu.vector_store %arg4[%c0_2, %c0_3, %c0_4], %0 {strides = array<i32>} : memref<1x8x128xf32, #tpu.memory_space<vmem>>, vector<1x8x128xf32>,
    %c0_5 = arith.constant 0 : index
    %c0_6 = arith.constant 0 : index
    %c0_7 = arith.constant 0 : index
    %c0_8 = arith.constant 0 : index
    %2 = vector.load %arg3[%c0_5, %c0_6, %c0_7, %c0_8] : memref<1x8x8x128xf32, #tpu.memory_space<vmem>>, vector<1x1x8x128xf32>
    %3 = vector.shape_cast %2 : vector<1x1x8x128xf32> to vector<1x8x128xf32>
    %cst = arith.constant 0.000000e+00 : f32
    %4 = vector.broadcast %cst : f32 to vector<1x8x128xf32>
    %5 = arith.cmpf oeq, %3, %4 : vector<1x8x128xf32>
    %c0_9 = arith.constant 0 : index
    %c0_10 = arith.constant 0 : index
    %c0_11 = arith.constant 0 : index
    %6 = vector.load %arg4[%c0_9, %c0_10, %c0_11] : memref<1x8x128xf32, #tpu.memory_space<vmem>>, vector<1x8x128xf32>
    %7 = arith.select %5, %6, %3 : vector<1x8x128xi1>, vector<1x8x128xf32>
    %c0_12 = arith.constant 0 : index
    %c0_13 = arith.constant 0 : index
    %c0_14 = arith.constant 0 : index
    %8 = vector.load %arg4[%c0_12, %c0_13, %c0_14] : memref<1x8x128xf32, #tpu.memory_space<vmem>>, vector<1x8x128xf32>
    tpu.vector_store %arg4[%c0_12, %c0_13, %c0_14], %7 {strides = array<i32>} : memref<1x8x128xf32, #tpu.memory_space<vmem>>, vector<1x8x128xf32>,
    %c0_15 = arith.constant 0 : index
    %c1 = arith.constant 1 : index
    %c0_16 = arith.constant 0 : index
    %c0_17 = arith.constant 0 : index
    %9 = vector.load %arg3[%c0_15, %c1, %c0_16, %c0_17] : memref<1x8x8x128xf32, #tpu.memory_space<vmem>>, vector<1x1x8x128xf32>
    %10 = vector.shape_cast %9 : vector<1x1x8x128xf32> to vector<1x8x128xf32>
    %cst_18 = arith.constant 0.000000e+00 : f32
    %11 = vector.broadcast %cst_18 : f32 to vector<1x8x128xf32>
    %12 = arith.cmpf oeq, %10, %11 : vector<1x8x128xf32>
    %c0_19 = arith.constant 0 : index
    %c0_20 = arith.constant 0 : index
    %c0_21 = arith.constant 0 : index
    %13 = vector.load %arg4[%c0_19, %c0_20, %c0_21] : memref<1x8x128xf32, #tpu.memory_space<vmem>>, vector<1x8x128xf32>
    %14 = arith.select %12, %13, %10 : vector<1x8x128xi1>, vector<1x8x128xf32>
    %c0_22 = arith.constant 0 : index
    %c0_23 = arith.constant 0 : index
    %c0_24 = arith.constant 0 : index
    %15 = vector.load %arg4[%c0_22, %c0_23, %c0_24] : memref<1x8x128xf32, #tpu.memory_space<vmem>>, vector<1x8x128xf32>
    tpu.vector_store %arg4[%c0_22, %c0_23, %c0_24], %14 {strides = array<i32>} : memref<1x8x128xf32, #tpu.memory_space<vmem>>, vector<1x8x128xf32>,
    %c0_25 = arith.constant 0 : index
    %c2 = arith.constant 2 : index
    %c0_26 = arith.constant 0 : index
    %c0_27 = arith.constant 0 : index
    %16 = vector.load %arg3[%c0_25, %c2, %c0_26, %c0_27] : memref<1x8x8x128xf32, #tpu.memory_space<vmem>>, vector<1x1x8x128xf32>
    %17 = vector.shape_cast %16 : vector<1x1x8x128xf32> to vector<1x8x128xf32>
    %cst_28 = arith.constant 0.000000e+00 : f32
    %18 = vector.broadcast %cst_28 : f32 to vector<1x8x128xf32>
    %19 = arith.cmpf oeq, %17, %18 : vector<1x8x128xf32>
    %c0_29 = arith.constant 0 : index
    %c0_30 = arith.constant 0 : index
    %c0_31 = arith.constant 0 : index
    %20 = vector.load %arg4[%c0_29, %c0_30, %c0_31] : memref<1x8x128xf32, #tpu.memory_space<vmem>>, vector<1x8x128xf32>
    %21 = arith.select %19, %20, %17 : vector<1x8x128xi1>, vector<1x8x128xf32>
    %c0_32 = arith.constant 0 : index
    %c0_33 = arith.constant 0 : index
    %c0_34 = arith.constant 0 : index
    %22 = vector.load %arg4[%c0_32, %c0_33, %c0_34] : memref<1x8x128xf32, #tpu.memory_space<vmem>>, vector<1x8x128xf32>
    tpu.vector_store %arg4[%c0_32, %c0_33, %c0_34], %21 {strides = array<i32>} : memref<1x8x128xf32, #tpu.memory_space<vmem>>, vector<1x8x128xf32>,
    %c0_35 = arith.constant 0 : index
    %c3 = arith.constant 3 : index
    %c0_36 = arith.constant 0 : index
    %c0_37 = arith.constant 0 : index
    %23 = vector.load %arg3[%c0_35, %c3, %c0_36, %c0_37] : memref<1x8x8x128xf32, #tpu.memory_space<vmem>>, vector<1x1x8x128xf32>
    %24 = vector.shape_cast %23 : vector<1x1x8x128xf32> to vector<1x8x128xf32>
    %cst_38 = arith.constant 0.000000e+00 : f32
    %25 = vector.broadcast %cst_38 : f32 to vector<1x8x128xf32>
    %26 = arith.cmpf oeq, %24, %25 : vector<1x8x128xf32>
    %c0_39 = arith.constant 0 : index
    %c0_40 = arith.constant 0 : index
    %c0_41 = arith.constant 0 : index
    %27 = vector.load %arg4[%c0_39, %c0_40, %c0_41] : memref<1x8x128xf32, #tpu.memory_space<vmem>>, vector<1x8x128xf32>
    %28 = arith.select %26, %27, %24 : vector<1x8x128xi1>, vector<1x8x128xf32>
    %c0_42 = arith.constant 0 : index
    %c0_43 = arith.constant 0 : index
    %c0_44 = arith.constant 0 : index
    %29 = vector.load %arg4[%c0_42, %c0_43, %c0_44] : memref<1x8x128xf32, #tpu.memory_space<vmem>>, vector<1x8x128xf32>
    tpu.vector_store %arg4[%c0_42, %c0_43, %c0_44], %28 {strides = array<i32>} : memref<1x8x128xf32, #tpu.memory_space<vmem>>, vector<1x8x128xf32>,
    %c0_45 = arith.constant 0 : index
    %c4 = arith.constant 4 : index
    %c0_46 = arith.constant 0 : index
    %c0_47 = arith.constant 0 : index
    %30 = vector.load %arg3[%c0_45, %c4, %c0_46, %c0_47] : memref<1x8x8x128xf32, #tpu.memory_space<vmem>>, vector<1x1x8x128xf32>
    %31 = vector.shape_cast %30 : vector<1x1x8x128xf32> to vector<1x8x128xf32>
    %cst_48 = arith.constant 0.000000e+00 : f32
    %32 = vector.broadcast %cst_48 : f32 to vector<1x8x128xf32>
    %33 = arith.cmpf oeq, %31, %32 : vector<1x8x128xf32>
    %c0_49 = arith.constant 0 : index
    %c0_50 = arith.constant 0 : index
    %c0_51 = arith.constant 0 : index
    %34 = vector.load %arg4[%c0_49, %c0_50, %c0_51] : memref<1x8x128xf32, #tpu.memory_space<vmem>>, vector<1x8x128xf32>
    %35 = arith.select %33, %34, %31 : vector<1x8x128xi1>, vector<1x8x128xf32>
    %c0_52 = arith.constant 0 : index
    %c0_53 = arith.constant 0 : index
    %c0_54 = arith.constant 0 : index
    %36 = vector.load %arg4[%c0_52, %c0_53, %c0_54] : memref<1x8x128xf32, #tpu.memory_space<vmem>>, vector<1x8x128xf32>
    tpu.vector_store %arg4[%c0_52, %c0_53, %c0_54], %35 {strides = array<i32>} : memref<1x8x128xf32, #tpu.memory_space<vmem>>, vector<1x8x128xf32>,
    %c0_55 = arith.constant 0 : index
    %c5 = arith.constant 5 : index
    %c0_56 = arith.constant 0 : index
    %c0_57 = arith.constant 0 : index
    %37 = vector.load %arg3[%c0_55, %c5, %c0_56, %c0_57] : memref<1x8x8x128xf32, #tpu.memory_space<vmem>>, vector<1x1x8x128xf32>
    %38 = vector.shape_cast %37 : vector<1x1x8x128xf32> to vector<1x8x128xf32>
    %cst_58 = arith.constant 0.000000e+00 : f32
    %39 = vector.broadcast %cst_58 : f32 to vector<1x8x128xf32>
    %40 = arith.cmpf oeq, %38, %39 : vector<1x8x128xf32>
    %c0_59 = arith.constant 0 : index
    %c0_60 = arith.constant 0 : index
    %c0_61 = arith.constant 0 : index
    %41 = vector.load %arg4[%c0_59, %c0_60, %c0_61] : memref<1x8x128xf32, #tpu.memory_space<vmem>>, vector<1x8x128xf32>
    %42 = arith.select %40, %41, %38 : vector<1x8x128xi1>, vector<1x8x128xf32>
    %c0_62 = arith.constant 0 : index
    %c0_63 = arith.constant 0 : index
    %c0_64 = arith.constant 0 : index
    %43 = vector.load %arg4[%c0_62, %c0_63, %c0_64] : memref<1x8x128xf32, #tpu.memory_space<vmem>>, vector<1x8x128xf32>
    tpu.vector_store %arg4[%c0_62, %c0_63, %c0_64], %42 {strides = array<i32>} : memref<1x8x128xf32, #tpu.memory_space<vmem>>, vector<1x8x128xf32>,
    %c0_65 = arith.constant 0 : index
    %c6 = arith.constant 6 : index
    %c0_66 = arith.constant 0 : index
    %c0_67 = arith.constant 0 : index
    %44 = vector.load %arg3[%c0_65, %c6, %c0_66, %c0_67] : memref<1x8x8x128xf32, #tpu.memory_space<vmem>>, vector<1x1x8x128xf32>
    %45 = vector.shape_cast %44 : vector<1x1x8x128xf32> to vector<1x8x128xf32>
    %cst_68 = arith.constant 0.000000e+00 : f32
    %46 = vector.broadcast %cst_68 : f32 to vector<1x8x128xf32>
    %47 = arith.cmpf oeq, %45, %46 : vector<1x8x128xf32>
    %c0_69 = arith.constant 0 : index
    %c0_70 = arith.constant 0 : index
    %c0_71 = arith.constant 0 : index
    %48 = vector.load %arg4[%c0_69, %c0_70, %c0_71] : memref<1x8x128xf32, #tpu.memory_space<vmem>>, vector<1x8x128xf32>
    %49 = arith.select %47, %48, %45 : vector<1x8x128xi1>, vector<1x8x128xf32>
    %c0_72 = arith.constant 0 : index
    %c0_73 = arith.constant 0 : index
    %c0_74 = arith.constant 0 : index
    %50 = vector.load %arg4[%c0_72, %c0_73, %c0_74] : memref<1x8x128xf32, #tpu.memory_space<vmem>>, vector<1x8x128xf32>
    tpu.vector_store %arg4[%c0_72, %c0_73, %c0_74], %49 {strides = array<i32>} : memref<1x8x128xf32, #tpu.memory_space<vmem>>, vector<1x8x128xf32>,
    %c0_75 = arith.constant 0 : index
    %c7 = arith.constant 7 : index
    %c0_76 = arith.constant 0 : index
    %c0_77 = arith.constant 0 : index
    %51 = vector.load %arg3[%c0_75, %c7, %c0_76, %c0_77] : memref<1x8x8x128xf32, #tpu.memory_space<vmem>>, vector<1x1x8x128xf32>
    %52 = vector.shape_cast %51 : vector<1x1x8x128xf32> to vector<1x8x128xf32>
    %cst_78 = arith.constant 0.000000e+00 : f32
    %53 = vector.broadcast %cst_78 : f32 to vector<1x8x128xf32>
    %54 = arith.cmpf oeq, %52, %53 : vector<1x8x128xf32>
    %c0_79 = arith.constant 0 : index
    %c0_80 = arith.constant 0 : index
    %c0_81 = arith.constant 0 : index
    %55 = vector.load %arg4[%c0_79, %c0_80, %c0_81] : memref<1x8x128xf32, #tpu.memory_space<vmem>>, vector<1x8x128xf32>
    %56 = arith.select %54, %55, %52 : vector<1x8x128xi1>, vector<1x8x128xf32>
    %c0_82 = arith.constant 0 : index
    %c0_83 = arith.constant 0 : index
    %c0_84 = arith.constant 0 : index
    %57 = vector.load %arg4[%c0_82, %c0_83, %c0_84] : memref<1x8x128xf32, #tpu.memory_space<vmem>>, vector<1x8x128xf32>
    tpu.vector_store %arg4[%c0_82, %c0_83, %c0_84], %56 {strides = array<i32>} : memref<1x8x128xf32, #tpu.memory_space<vmem>>, vector<1x8x128xf32>,
    return
  }
  func.func @transform_0(%arg0: i32, %arg1: i32) -> (i32, i32, i32) {
    %c0_i32 = arith.constant 0 : i32
    %c0_i32_0 = arith.constant 0 : i32
    return %arg0, %arg1, %c0_i32 : i32, i32, i32
  }
  func.func @transform_1(%arg0: i32, %arg1: i32) -> (i32, i32, i32, i32) {
    %c0_i32 = arith.constant 0 : i32
    %c0_i32_0 = arith.constant 0 : i32
    %c0_i32_1 = arith.constant 0 : i32
    return %arg0, %c0_i32, %arg1, %c0_i32_0 : i32, i32, i32, i32
  }
  func.func @transform_2(%arg0: i32, %arg1: i32) -> (i32, i32, i32) {
    %c0_i32 = arith.constant 0 : i32
    %c0_i32_0 = arith.constant 0 : i32
    return %arg0, %arg1, %c0_i32 : i32, i32, i32
  }
}

</mosaic_0001>

<llo_original>
// kernel: tpu_custom_call.1
$region0: #{tpu_custom_call.1}
  #allocation0 [shape = 'u32[]', space=smem, size = 0x4, offset = 0x4, fixed_abs, tag = 'smem constant byte address 0x4 - core index']
  #allocation1 [shape = 'u32[72,128]{1,0:T(1,128)}', space=vmem, size = 0x9000, scoped, tag = 'internal scratch']
  %s0 = inlined_call_operand.vmem [shape: f32[2,6,128], index: 0, kind: input, shape index: {}]
  %s1 = inlined_call_operand.vmem [shape: f32[2,8,6,128], index: 1, kind: input, shape index: {}]
  %s2 = inlined_call_operand.vmem [shape: f32[2,6,128], index: 2, kind: output, shape index: {}]
  %s3 = sld [smem:[#allocation0]]
  $region41: #{tpu_custom_call.1} parent=0
    _
  %s5 = ssub.s32 1, %s3
  %s6 = scalar_select 0, %s5, %s3
  loop: start=0, step=1, limit=4
  $region2: #{tpu_custom_call.1} parent=0 // loop_pre_header
    _
  $region3: #{tpu_custom_call.1} parent=0 // loop_header
    %s8 = sphi 0, %s12
    %p9 = scmp.ge.s32.totalorder %s8, 4
    %s15 = sphi 0, %s27
    %s16 = sphi 0, %s23
    %s17 = sphi 0, %s15
    %s18 = sphi 0, %s16
    %s19 = sphi 0, %s17
    %s20 = sphi 0, %s18
    %s32 = sphi 0, %s34
    %s35 = sphi 0, %s32
    %s36 = sphi 0, %s35
    %s52 = sphi 0, %s36
    %s60 = sphi 0, %s62
    %s63 = sphi 0, %s60
    %s64 = sphi 0, %s63
    %s80 = sphi 0, %s64
    %s88 = sphi 0, %s90
    %s91 = sphi 0, %s88
    %s92 = sphi 0, %s91
    %s108 = sphi 0, %s92
  $region4: #{tpu_custom_call.1} parent=0 // loop_header_branch
    %11 = sbr.rel (%p9) target = $region8
  $region5: #{tpu_custom_call.1} parent=0 // loop_body
    %s13 = ssub.s32 %s8, 1
    %s14 = ssub.s32 %s8, 2
    %s21 = sadd.s32 1, %s16
    %p22 = scmp.ge.s32.totalorder %s21, 1
    %s23 = scalar_select %p22, 0, %s21
    %s24 = sadd.s32 1, %s15
    %s25 = scalar_select %p22, %s24, %s15
    %p26 = scmp.ge.s32.totalorder %s25, 2
    %s27 = scalar_select %p26, 0, %s25
    %s28 = ssub.s32 %s15, %s27
    %s29 = ssub.s32 %s16, %s23
    %s30 = sor.u32 %s28, %s29
    %p31 = scmp.eq.s32.totalorder %s30, 0
    %s33 = sadd.s32 %s32, 1
    %s34 = scalar_select %p31, %s32, %s33
    %p37 = pneg %p31
    %p38 = scmp.eq.s32.totalorder %s8, 1
    %p39 = por %p37, %p38
    %p40 = scmp.ne.s32.totalorder %s32, %s35
    %p41 = scmp.eq.s32.totalorder %s8, 0
    %p42 = por %p40, %p41
    %p43 = scmp.ne.s32.totalorder %s32, %s35
    %p44 = scmp.eq.s32.totalorder %s13, 1
    %p45 = por %p43, %p44
    %p46 = scmp.ne.s32.totalorder %s35, %s36
    %p47 = scmp.eq.s32.totalorder %s13, 0
    %p48 = por %p46, %p47
    %p49 = scmp.ne.s32.totalorder %s35, %s36
    %p50 = scmp.eq.s32.totalorder %s14, 1
    %p51 = por %p49, %p50
    %p53 = scmp.ne.s32.totalorder %s36, %s52
    %p54 = scmp.eq.s32.totalorder %s14, 0
    %p55 = por %p53, %p54
    %s56 = ssub.s32 %s15, %s27
    %s57 = ssub.s32 %s16, %s23
    %s58 = sor.u32 %s56, %s57
    %p59 = scmp.eq.s32.totalorder %s58, 0
    %s61 = sadd.s32 %s60, 1
    %s62 = scalar_select %p59, %s60, %s61
    %p65 = pneg %p59
    %p66 = scmp.eq.s32.totalorder %s8, 1
    %p67 = por %p65, %p66
    %p68 = scmp.ne.s32.totalorder %s60, %s63
    %p69 = scmp.eq.s32.totalorder %s8, 0
    %p70 = por %p68, %p69
    %p71 = scmp.ne.s32.totalorder %s60, %s63
    %p72 = scmp.eq.s32.totalorder %s13, 1
    %p73 = por %p71, %p72
    %p74 = scmp.ne.s32.totalorder %s63, %s64
    %p75 = scmp.eq.s32.totalorder %s13, 0
    %p76 = por %p74, %p75
    %p77 = scmp.ne.s32.totalorder %s63, %s64
    %p78 = scmp.eq.s32.totalorder %s14, 1
    %p79 = por %p77, %p78
    %p81 = scmp.ne.s32.totalorder %s64, %s80
    %p82 = scmp.eq.s32.totalorder %s14, 0
    %p83 = por %p81, %p82
    %s84 = ssub.s32 %s15, %s27
    %s85 = ssub.s32 %s16, %s23
    %s86 = sor.u32 %s84, %s85
    %p87 = scmp.eq.s32.totalorder %s86, 0
    %s89 = sadd.s32 %s88, 1
    %s90 = scalar_select %p87, %s88, %s89
    %p93 = pneg %p87
    %p94 = scmp.eq.s32.totalorder %s8, 1
    %p95 = por %p93, %p94
    %p96 = scmp.ne.s32.totalorder %s88, %s91
    %p97 = scmp.eq.s32.totalorder %s8, 0
    %p98 = por %p96, %p97
    %p99 = scmp.ne.s32.totalorder %s88, %s91
    %p100 = scmp.eq.s32.totalorder %s13, 1
    %p101 = por %p99, %p100
    %p102 = scmp.ne.s32.totalorder %s91, %s92
    %p103 = scmp.eq.s32.totalorder %s13, 0
    %p104 = por %p102, %p103
    %p105 = scmp.ne.s32.totalorder %s91, %s92
    %p106 = scmp.eq.s32.totalorder %s14, 1
    %p107 = por %p105, %p106
    %p109 = scmp.ne.s32.totalorder %s92, %s108
    %p110 = scmp.eq.s32.totalorder %s14, 0
    %p111 = por %p109, %p110
    %p112 = scmp.le.s32.totalorder 1, %s8
    %p113 = scmp.lt.s32.totalorder %s8, 3
    %p114 = pnand %p112, %p113
    %p115 = pneg %p114
    // Predicated region
    $region9: #{tpu_custom_call.1} parent=5 // pred_check
      _
    $region10: #{tpu_custom_call.1} parent=5 // pred_check_branch
      %117 = sbr.rel (%p114) target = $region12
    $region11: #{tpu_custom_call.1} parent=5 // pred_region
      %s118 = ssub.s32 %s8, 1
    $region12: #{tpu_custom_call.1} parent=5 // pred_fallthru
      _
    %p119 = scmp.lt.s32.totalorder %s8, 2
    // Predicated region
    $region13: #{tpu_custom_call.1} parent=5 // pred_check
      %p120 = pneg %p119
    $region14: #{tpu_custom_call.1} parent=5 // pred_check_branch
      %122 = sbr.rel (%p120) target = $region16
    $region15: #{tpu_custom_call.1} parent=5 // pred_region
      // Predicated region
      $region17: #{tpu_custom_call.1} parent=15 // pred_check
        %p123 = pneg %p42
      $region18: #{tpu_custom_call.1} parent=15 // pred_check_branch
        %125 = sbr.rel (%p123) target = $region20
      $region19: #{tpu_custom_call.1} parent=15 // pred_region
        %p126 = scmp.lt.s32.totalorder %s15, 1
        %s127 = scalar_select %p126, %s15, 1
        %p128 = scmp.lt.s32.totalorder %s16, 0
        %s129 = scalar_select %p128, %s16, 0
        %s130 = sadd.s32 %s129, %s127
        %s131 = smul.addr %s130, 8
        %s132 = scalar_lea.vmem %s0, %s131
      $region20: #{tpu_custom_call.1} parent=15 // pred_fallthru
        _
      // Predicated region
      $region21: #{tpu_custom_call.1} parent=15 // pred_check
        %p133 = pneg %p70
      $region22: #{tpu_custom_call.1} parent=15 // pred_check_branch
        %135 = sbr.rel (%p133) target = $region24
      $region23: #{tpu_custom_call.1} parent=15 // pred_region
        %p136 = scmp.lt.s32.totalorder %s15, 1
        %s137 = scalar_select %p136, %s15, 1
        %p138 = scmp.lt.s32.totalorder %s16, 0
        %s139 = scalar_select %p138, %s16, 0
        %s140 = smul.addr %s137, 8
        %s141 = sadd.s32 %s139, %s140
        %s142 = smul.addr %s141, 8
        %s143 = scalar_lea.vmem %s1, %s142
      $region24: #{tpu_custom_call.1} parent=15 // pred_fallthru
        _
    $region16: #{tpu_custom_call.1} parent=5 // pred_fallthru
      _
    %p144 = scmp.le.s32.totalorder 1, %s8
    %p145 = scmp.lt.s32.totalorder %s8, 3
    %p146 = pnand %p144, %p145
    %p147 = pneg %p146
    // Predicated region
    $region25: #{tpu_custom_call.1} parent=5 // pred_check
      _
    $region26: #{tpu_custom_call.1} parent=5 // pred_check_branch
      %149 = sbr.rel (%p146) target = $region28
    $region27: #{tpu_custom_call.1} parent=5 // pred_region
      %s150 = ssub.s32 %s8, 1
      %p151 = scmp.lt.s32.totalorder %s17, 1
      %s152 = scalar_select %p151, %s17, 1
      %p153 = scmp.lt.s32.totalorder %s18, 0
      %s154 = scalar_select %p153, %s18, 0
      %s155 = sadd.s32 %s154, %s152
      %s156 = smul.addr %s155, 8
      %s157 = scalar_lea.vmem %s0, %s156
      %p158 = pneg %p48
      %p159 = pneg %p45
      %p160 = scmp.lt.s32.totalorder %s17, 1
      %s161 = scalar_select %p160, %s17, 1
      %p162 = scmp.lt.s32.totalorder %s18, 0
      %s163 = scalar_select %p162, %s18, 0
      %s164 = smul.addr %s161, 8
      %s165 = sadd.s32 %s163, %s164
      %s166 = smul.addr %s165, 8
      %s167 = scalar_lea.vmem %s1, %s166
      %p168 = pneg %p76
      %p169 = pneg %p73
      %p170 = pneg %p104
      %p171 = pneg %p101
      %p172 = scmp.lt.s32.totalorder %s17, 1
      %s173 = scalar_select %p172, %s17, 1
      %p174 = scmp.lt.s32.totalorder %s18, 0
      %s175 = scalar_select %p174, %s18, 0
      %s176 = sadd.s32 %s175, %s173
      %s177 = smul.addr %s176, 8
      %s178 = scalar_lea.vmem %s2, %s177
      %p179 = scmp.lt.s32.totalorder %s17, 1
      %s180 = scalar_select %p179, %s17, 1
      %p181 = scmp.lt.s32.totalorder %s18, 0
      %s182 = scalar_select %p181, %s18, 0
      %s183 = sadd.s32 %s182, %s180
      %s184 = smul.addr %s183, 8
      %s185 = scalar_lea.vmem %s0, %s184
      %p186 = scmp.lt.s32.totalorder %s17, 1
      %s187 = scalar_select %p186, %s17, 1
      %p188 = scmp.lt.s32.totalorder %s18, 0
      %s189 = scalar_select %p188, %s18, 0
      %s190 = smul.addr %s187, 8
      %s191 = sadd.s32 %s189, %s190
      %s192 = smul.addr %s191, 8
      %s193 = scalar_lea.vmem %s1, %s192
      %p194 = scmp.lt.s32.totalorder %s17, 1
      %s195 = scalar_select %p194, %s17, 1
      %p196 = scmp.lt.s32.totalorder %s18, 0
      %s197 = scalar_select %p196, %s18, 0
      %s198 = sadd.s32 %s197, %s195
      %s199 = smul.addr %s198, 8
      %s200 = scalar_lea.vmem %s2, %s199
      %v201 = vld [vmem:[%s185] sm:$0xff]
      %202 = vst [vmem:[%s200] sm:$0xff] %v201
      %v203 = vld [vmem:[%s193] sm:$0xff]
      %vm204 = vcmp.eq.f32.partialorder %v203, 0.0
      %v205 = vld [vmem:[%s200] sm:$0xff]
      %v206 = vsel %vm204, %v205, %v203
      %207 = vst [vmem:[%s200] sm:$0xff] %v206
      %s208 = scalar_lea.vmem %s193, 8
      %v209 = vld [vmem:[%s208] sm:$0xff]
      %vm210 = vcmp.eq.f32.partialorder %v209, 0.0
      %v211 = vld [vmem:[%s200] sm:$0xff]
      %v212 = vsel %vm210, %v211, %v209
      %213 = vst [vmem:[%s200] sm:$0xff] %v212
      %s214 = scalar_lea.vmem %s193, 16
      %v215 = vld [vmem:[%s214] sm:$0xff]
      %vm216 = vcmp.eq.f32.partialorder %v215, 0.0
      %v217 = vld [vmem:[%s200] sm:$0xff]
      %v218 = vsel %vm216, %v217, %v215
      %219 = vst [vmem:[%s200] sm:$0xff] %v218
      %s220 = scalar_lea.vmem %s193, 24
      %v221 = vld [vmem:[%s220] sm:$0xff]
      %vm222 = vcmp.eq.f32.partialorder %v221, 0.0
      %v223 = vld [vmem:[%s200] sm:$0xff]
      %v224 = vsel %vm222, %v223, %v221
      %225 = vst [vmem:[%s200] sm:$0xff] %v224
      %s226 = scalar_lea.vmem %s193, 32
      %v227 = vld [vmem:[%s226] sm:$0xff]
      %vm228 = vcmp.eq.f32.partialorder %v227, 0.0
      %v229 = vld [vmem:[%s200] sm:$0xff]
      %v230 = vsel %vm228, %v229, %v227
      %231 = vst [vmem:[%s200] sm:$0xff] %v230
      %s232 = scalar_lea.vmem %s193, 40
      %v233 = vld [vmem:[%s232] sm:$0xff]
      %vm234 = vcmp.eq.f32.partialorder %v233, 0.0
      %v235 = vld [vmem:[%s200] sm:$0xff]
      %v236 = vsel %vm234, %v235, %v233
      %237 = vst [vmem:[%s200] sm:$0xff] %v236
      %s238 = scalar_lea.vmem %s193, 48
      %v239 = vld [vmem:[%s238] sm:$0xff]
      %vm240 = vcmp.eq.f32.partialorder %v239, 0.0
      %v241 = vld [vmem:[%s200] sm:$0xff]
      %v242 = vsel %vm240, %v241, %v239
      %243 = vst [vmem:[%s200] sm:$0xff] %v242
      %s244 = scalar_lea.vmem %s193, 56
      %v245 = vld [vmem:[%s244] sm:$0xff]
      %vm246 = vcmp.eq.f32.partialorder %v245, 0.0
      %v247 = vld [vmem:[%s200] sm:$0xff]
      %v248 = vsel %vm246, %v247, %v245
      %249 = vst [vmem:[%s200] sm:$0xff] %v248
      %p250 = scmp.lt.s32.totalorder %s17, 1
      %s251 = scalar_select %p250, %s17, 1
      %p252 = scmp.lt.s32.totalorder %s18, 0
      %s253 = scalar_select %p252, %s18, 0
      %s254 = sadd.s32 %s253, %s251
      %s255 = smul.addr %s254, 8
      %s256 = scalar_lea.vmem %s2, %s255
      // Predicated region
      $region29: #{tpu_custom_call.1} parent=27 // pred_check
        %p257 = pneg %p101
      $region30: #{tpu_custom_call.1} parent=27 // pred_check_branch
        %259 = sbr.rel (%p257) target = $region32
      $region31: #{tpu_custom_call.1} parent=27 // pred_region
        _
      $region32: #{tpu_custom_call.1} parent=27 // pred_fallthru
        _
    $region28: #{tpu_custom_call.1} parent=5 // pred_fallthru
      _
    %p260 = scmp.le.s32.totalorder 2, %s8
    // Predicated region
    $region33: #{tpu_custom_call.1} parent=5 // pred_check
      %p261 = pneg %p260
    $region34: #{tpu_custom_call.1} parent=5 // pred_check_branch
      %263 = sbr.rel (%p261) target = $region36
    $region35: #{tpu_custom_call.1} parent=5 // pred_region
      %s264 = ssub.s32 %s8, 2
      // Predicated region
      $region37: #{tpu_custom_call.1} parent=35 // pred_check
        %p265 = pneg %p107
      $region38: #{tpu_custom_call.1} parent=35 // pred_check_branch
        %267 = sbr.rel (%p265) target = $region40
      $region39: #{tpu_custom_call.1} parent=35 // pred_region
        %p268 = scmp.lt.s32.totalorder %s19, 1
        %s269 = scalar_select %p268, %s19, 1
        %p270 = scmp.lt.s32.totalorder %s20, 0
        %s271 = scalar_select %p270, %s20, 0
        %s272 = sadd.s32 %s271, %s269
        %s273 = smul.addr %s272, 8
        %s274 = scalar_lea.vmem %s2, %s273
      $region40: #{tpu_custom_call.1} parent=35 // pred_fallthru
        _
    $region36: #{tpu_custom_call.1} parent=5 // pred_fallthru
      _
  $region6: #{tpu_custom_call.1} parent=0 // loop_footer
    %s12 = sadd.s32 1, %s8
  $region7: #{tpu_custom_call.1} parent=0 // loop_footer_branch
    %7 = sbr.rel target = $region3
  $region8: #{tpu_custom_call.1} parent=0 // loop_exit
    _

</llo_original>
